<compile_context>
chip_gen: v7x
topology: tpu7x:2x2x1
jax: 0.10.0
libtpu: 0.0.40
codegen_flags: <defaults>
</compile_context>

<pallas_src>
import jax
import jax.numpy as jnp
from jax.experimental import pallas as pl
from jax.experimental.pallas import tpu as pltpu

INPUT_SIZE = 6       # IMU: 3 accel + 3 gyro
HIDDEN_SIZE = 32     # cfg['hidden-size'][0]
SEQ_LEN = 8


def _round_up(x, m):
    return ((x + m - 1) // m) * m


def _lstm_kernel(x_ref, wih_ref, whh_ref, b_ref, out_ref, gx_ref):
    """One batch-tile: full LSTM recurrence over S timesteps, emit last h.

    x_ref:   (S*B_TILE, N)  time-major within the tile (t-major, then batch)
    wih_ref: (N, 4H)  — i/f/o columns pre-scaled by 0.5 (sigmoid-via-tanh)
    whh_ref: (H, 4H)  — same column scaling
    b_ref:   (1, 4H)  — same column scaling
    out_ref: (B_TILE, H)
    gx_ref:  VMEM scratch (S*B_TILE, 4H) holding the hoisted input projection
    """
    Bt, H = out_ref.shape
    SB = x_ref.shape[0]
    S = SB // Bt

    # Hoisted input projection + bias: one big MXU matmul, off the serial chain.
    gx_ref[...] = (
        jnp.dot(x_ref[...], wih_ref[...], preferred_element_type=jnp.float32)
        + b_ref[...]
    )

    whh = whh_ref[...]                          # (H, 4H), loaded once
    h = jnp.zeros((Bt, H), jnp.float32)
    c = jnp.zeros((Bt, H), jnp.float32)

    # S is small and static: unroll the recurrence; h/c stay register-resident.
    for t in range(S):
        z = gx_ref[t * Bt:(t + 1) * Bt, :] + jnp.dot(
            h, whh, preferred_element_type=jnp.float32)      # (Bt, 4H)
        tz = jnp.tanh(z)                                      # single EUP pass
        # sigmoid(x) = 0.5*tanh(x/2) + 0.5 ; the 0.5 pre-scale of i/f/o columns
        # was folded into the weights/bias in the wrapper.  g is plain tanh.
        i = 0.5 * tz[:, 0 * H:1 * H] + 0.5
        f = 0.5 * tz[:, 1 * H:2 * H] + 0.5
        g = tz[:, 2 * H:3 * H]
        o = 0.5 * tz[:, 3 * H:4 * H] + 0.5
        c = f * c + i * g
        h = o * jnp.tanh(c)

    out_ref[...] = h.astype(out_ref.dtype)


@jax.jit
def imu_feat_rnn1_forward(x_bsn, w_ih, w_hh, b_ih, b_hh):
    """x_bsn: (B, S, N) float32 (already-flattened nested list).
       Weights in PyTorch LSTM layout: w_ih (4H, N), w_hh (4H, H), biases (4H,).
       Returns (B, H) = last forward-direction hidden state per sequence."""
    B, S, N = x_bsn.shape
    H = w_hh.shape[1]
    G = 4 * H

    # --- batch tiling ----------------------------------------------------
    # Large tiles amortize per-grid-step overhead and fill the MXU; keep at
    # least two grid steps when the batch is big enough so the "parallel"
    # axis can shard across both TensorCores on v7x.
    if B <= 8:
        B_TILE = _round_up(max(B, 1), 8)
    else:
        half = _round_up((B + 1) // 2, 8)
        B_TILE = min(128, half)
    B_pad = _round_up(B, B_TILE)
    num_tiles = B_pad // B_TILE

    # Pad batch (padded rows are computed and discarded) and lay x out so each
    # grid step reads a contiguous 2D (S*B_TILE, N) slab: t-major, then batch.
    x_pad = jnp.zeros((B_pad, S, N), jnp.float32).at[:B].set(x_bsn)
    x_flat = (
        x_pad.reshape(num_tiles, B_TILE, S, N)
        .transpose(0, 2, 1, 3)                      # (tiles, S, B_TILE, N)
        .reshape(num_tiles * S * B_TILE, N)
    )

    # --- weight prep: transpose + fold 0.5 into i/f/o columns -------------
    # sigmoid(z) = 0.5*tanh(0.5*z) + 0.5, so scale i/f/o pre-activations by 0.5
    # (weights AND bias); g (cell candidate, columns 2H:3H) stays unscaled.
    gate_scale = jnp.concatenate([
        jnp.full((2 * H,), 0.5, jnp.float32),       # i, f
        jnp.ones((H,), jnp.float32),                # g
        jnp.full((H,), 0.5, jnp.float32),           # o
    ])
    wih_t = w_ih.T * gate_scale[None, :]            # (N, 4H)
    whh_t = w_hh.T * gate_scale[None, :]            # (H, 4H)
    bias = ((b_ih + b_hh) * gate_scale).reshape(1, G)

    out = pl.pallas_call(
        _lstm_kernel,
        out_shape=jax.ShapeDtypeStruct((B_pad, H), jnp.float32),
        grid_spec=pltpu.PrefetchScalarGridSpec(
            num_scalar_prefetch=0,
            grid=(num_tiles,),
            in_specs=[
                pl.BlockSpec((S * B_TILE, N), lambda b: (b, 0)),   # x tile
                pl.BlockSpec((N, G), lambda b: (0, 0)),            # W_ih^T (scaled)
                pl.BlockSpec((H, G), lambda b: (0, 0)),            # W_hh^T (scaled)
                pl.BlockSpec((1, G), lambda b: (0, 0)),            # bias (scaled)
            ],
            out_specs=pl.BlockSpec((B_TILE, H), lambda b: (b, 0)),
            scratch_shapes=[
                pltpu.VMEM((S * B_TILE, G), jnp.float32),          # hoisted gx
            ],
        ),
        compiler_params=pltpu.CompilerParams(
            dimension_semantics=("parallel",),
        ),
    )(x_flat, wih_t, whh_t, bias)
    return out[:B]


def _lstm_reference(x_bsn, w_ih, w_hh, b_ih, b_hh):
    """Pure-JAX reference of torch.nn.LSTM (last step, forward direction)."""
    B, S, N = x_bsn.shape
    H = w_hh.shape[1]
    wih_t, whh_t, b = w_ih.T, w_hh.T, (b_ih + b_hh)
    h = jnp.zeros((B, H), jnp.float32)
    c = jnp.zeros((B, H), jnp.float32)
    for t in range(S):
        gates = x_bsn[:, t, :] @ wih_t + h @ whh_t + b
        i = jax.nn.sigmoid(gates[:, 0 * H:1 * H])
        f = jax.nn.sigmoid(gates[:, 1 * H:2 * H])
        g = jnp.tanh(gates[:, 2 * H:3 * H])
        o = jax.nn.sigmoid(gates[:, 3 * H:4 * H])
        c = f * c + i * g
        h = o * jnp.tanh(c)
    return h


if __name__ == "__main__":
    key = jax.random.PRNGKey(0)
    N, H, S = INPUT_SIZE, HIDDEN_SIZE, SEQ_LEN

    # Deterministic parameter init, PyTorch-style U(-1/sqrt(H), 1/sqrt(H)).
    k1, k2, k3, k4, kx, kx2 = jax.random.split(key, 6)
    bound = 1.0 / jnp.sqrt(jnp.float32(H))
    w_ih = jax.random.uniform(k1, (4 * H, N), jnp.float32, -bound, bound)
    w_hh = jax.random.uniform(k2, (4 * H, H), jnp.float32, -bound, bound)
    b_ih = jax.random.uniform(k3, (4 * H,), jnp.float32, -bound, bound)
    b_hh = jax.random.uniform(k4, (4 * H,), jnp.float32, -bound, bound)

    # Nested list-of-lists of IMU sequences, as the torch module expects:
    # x = [[xx, xx], [xx, xx]], each xx: (S, N).
    seqs = jax.random.normal(kx, (2, 2, S, N), jnp.float32)
    x_nested = [[seqs[i, j] for j in range(2)] for i in range(2)]

    # Flatten exactly like `x_all = [xx for x_ in x for xx in x_]` -> (B, S, N).
    x_all = [xx for x_ in x_nested for xx in x_]
    x_bsn = jnp.stack(x_all, axis=0)                      # (4, 8, 6)

    out = imu_feat_rnn1_forward(x_bsn, w_ih, w_hh, b_ih, b_hh)
    out = jax.block_until_ready(out)
    ref = _lstm_reference(x_bsn, w_ih, w_hh, b_ih, b_hh)
    assert out.shape == (x_bsn.shape[0], H), out.shape
    assert jnp.allclose(out, ref, atol=1e-5, rtol=1e-5), "mismatch vs reference"

    # Second check: larger batch exercises padding + multi-tile grid path.
    x_big = jax.random.normal(kx2, (20, S, N), jnp.float32)
    out_big = jax.block_until_ready(
        imu_feat_rnn1_forward(x_big, w_ih, w_hh, b_ih, b_hh))
    ref_big = _lstm_reference(x_big, w_ih, w_hh, b_ih, b_hh)
    assert out_big.shape == (20, H), out_big.shape
    assert jnp.allclose(out_big, ref_big, atol=1e-5, rtol=1e-5), "mismatch (big)"

    # TODO(synk): num_layers > 1 / bidirectional=True / GRU variants not
    # configured here (module defaults: single-layer unidirectional LSTM).
    print("KERNEL_OK")
</pallas_src>

<mosaic_0001>
module attributes {stable_mosaic.version = 11 : i64} {
  func.func @_lstm_kernel(%arg0: i32, %arg1: memref<64x6xf32, #tpu.memory_space<vmem>>, %arg2: memref<6x128xf32, #tpu.memory_space<vmem>>, %arg3: memref<32x128xf32, #tpu.memory_space<vmem>>, %arg4: memref<1x128xf32, #tpu.memory_space<vmem>>, %arg5: memref<8x32xf32, #tpu.memory_space<vmem>>, %arg6: memref<64x128xf32, #tpu.memory_space<vmem>>) attributes {dimension_semantics = [#tpu.dimension_semantics<parallel>], iteration_bounds = array<i64: 1>, scalar_prefetch = 0 : i64, scratch_operands = 1 : i64, tpu.core_type = #tpu.core_type<tc>, window_params = [{transform_indices = @transform_0, window_bounds = array<i64: 64, 6>}, {pipeline_mode = #tpu.pipeline_mode<synchronous>, transform_indices = @transform_1, window_bounds = array<i64: 6, 128>}, {pipeline_mode = #tpu.pipeline_mode<synchronous>, transform_indices = @transform_2, window_bounds = array<i64: 32, 128>}, {pipeline_mode = #tpu.pipeline_mode<synchronous>, transform_indices = @transform_3, window_bounds = array<i64: 1, 128>}, {transform_indices = @transform_4, window_bounds = array<i64: 8, 32>}]} {
    %c0 = arith.constant 0 : index
    %c0_0 = arith.constant 0 : index
    %0 = vector.load %arg1[%c0, %c0_0] : memref<64x6xf32, #tpu.memory_space<vmem>>, vector<64x6xf32>
    %c0_1 = arith.constant 0 : index
    %c0_2 = arith.constant 0 : index
    %1 = vector.load %arg2[%c0_1, %c0_2] : memref<6x128xf32, #tpu.memory_space<vmem>>, vector<6x128xf32>
    %cst = arith.constant dense<0.000000e+00> : vector<64x128xf32>
    %2 = tpu.matmul %0, %1, %cst {dimension_numbers = #tpu.dot_dimension_numbers<[1], [0], [0], [1], [0, 0, 1, 1], [], []>} : vector<64x6xf32>, vector<6x128xf32>, vector<64x128xf32> -> vector<64x128xf32>
    %c0_3 = arith.constant 0 : index
    %c0_4 = arith.constant 0 : index
    %3 = vector.load %arg4[%c0_3, %c0_4] : memref<1x128xf32, #tpu.memory_space<vmem>>, vector<1x128xf32>
    %4 = vector.broadcast %3 : vector<1x128xf32> to vector<64x128xf32>
    %5 = arith.addf %2, %4 : vector<64x128xf32>
    %c0_5 = arith.constant 0 : index
    %c0_6 = arith.constant 0 : index
    %6 = vector.load %arg6[%c0_5, %c0_6] : memref<64x128xf32, #tpu.memory_space<vmem>>, vector<64x128xf32>
    tpu.vector_store %arg6[%c0_5, %c0_6], %5 {strides = array<i32>} : memref<64x128xf32, #tpu.memory_space<vmem>>, vector<64x128xf32>,
    %c0_7 = arith.constant 0 : index
    %c0_8 = arith.constant 0 : index
    %7 = vector.load %arg3[%c0_7, %c0_8] : memref<32x128xf32, #tpu.memory_space<vmem>>, vector<32x128xf32>
    %cst_9 = arith.constant 0.000000e+00 : f32
    %8 = vector.broadcast %cst_9 : f32 to vector<8x32xf32>
    %cst_10 = arith.constant 0.000000e+00 : f32
    %9 = vector.broadcast %cst_10 : f32 to vector<8x32xf32>
    %c0_11 = arith.constant 0 : index
    %c0_12 = arith.constant 0 : index
    %10 = vector.load %arg6[%c0_11, %c0_12] : memref<64x128xf32, #tpu.memory_space<vmem>>, vector<8x128xf32>
    %cst_13 = arith.constant dense<0.000000e+00> : vector<8x128xf32>
    %11 = tpu.matmul %8, %7, %cst_13 {dimension_numbers = #tpu.dot_dimension_numbers<[1], [0], [0], [1], [0, 0, 1, 1], [], []>} : vector<8x32xf32>, vector<32x128xf32>, vector<8x128xf32> -> vector<8x128xf32>
    %12 = arith.addf %10, %11 : vector<8x128xf32>
    %13 = math.tanh %12 : vector<8x128xf32>
    %14 = vector.extract_strided_slice %13 {offsets = [0, 0], sizes = [8, 32], strides = [1, 1]} : vector<8x128xf32> to vector<8x32xf32>
    %cst_14 = arith.constant 5.000000e-01 : f32
    %15 = vector.broadcast %cst_14 : f32 to vector<8x32xf32>
    %16 = arith.mulf %15, %14 : vector<8x32xf32>
    %cst_15 = arith.constant 5.000000e-01 : f32
    %17 = vector.broadcast %cst_15 : f32 to vector<8x32xf32>
    %18 = arith.addf %16, %17 : vector<8x32xf32>
    %19 = vector.extract_strided_slice %13 {offsets = [0, 32], sizes = [8, 32], strides = [1, 1]} : vector<8x128xf32> to vector<8x32xf32>
    %cst_16 = arith.constant 5.000000e-01 : f32
    %20 = vector.broadcast %cst_16 : f32 to vector<8x32xf32>
    %21 = arith.mulf %20, %19 : vector<8x32xf32>
    %cst_17 = arith.constant 5.000000e-01 : f32
    %22 = vector.broadcast %cst_17 : f32 to vector<8x32xf32>
    %23 = arith.addf %21, %22 : vector<8x32xf32>
    %24 = vector.extract_strided_slice %13 {offsets = [0, 64], sizes = [8, 32], strides = [1, 1]} : vector<8x128xf32> to vector<8x32xf32>
    %25 = vector.extract_strided_slice %13 {offsets = [0, 96], sizes = [8, 32], strides = [1, 1]} : vector<8x128xf32> to vector<8x32xf32>
    %cst_18 = arith.constant 5.000000e-01 : f32
    %26 = vector.broadcast %cst_18 : f32 to vector<8x32xf32>
    %27 = arith.mulf %26, %25 : vector<8x32xf32>
    %cst_19 = arith.constant 5.000000e-01 : f32
    %28 = vector.broadcast %cst_19 : f32 to vector<8x32xf32>
    %29 = arith.addf %27, %28 : vector<8x32xf32>
    %30 = arith.mulf %23, %9 : vector<8x32xf32>
    %31 = arith.mulf %18, %24 : vector<8x32xf32>
    %32 = arith.addf %30, %31 : vector<8x32xf32>
    %33 = math.tanh %32 : vector<8x32xf32>
    %34 = arith.mulf %29, %33 : vector<8x32xf32>
    %c8 = arith.constant 8 : index
    %c0_20 = arith.constant 0 : index
    %35 = vector.load %arg6[%c8, %c0_20] : memref<64x128xf32, #tpu.memory_space<vmem>>, vector<8x128xf32>
    %cst_21 = arith.constant dense<0.000000e+00> : vector<8x128xf32>
    %36 = tpu.matmul %34, %7, %cst_21 {dimension_numbers = #tpu.dot_dimension_numbers<[1], [0], [0], [1], [0, 0, 1, 1], [], []>} : vector<8x32xf32>, vector<32x128xf32>, vector<8x128xf32> -> vector<8x128xf32>
    %37 = arith.addf %35, %36 : vector<8x128xf32>
    %38 = math.tanh %37 : vector<8x128xf32>
    %39 = vector.extract_strided_slice %38 {offsets = [0, 0], sizes = [8, 32], strides = [1, 1]} : vector<8x128xf32> to vector<8x32xf32>
    %cst_22 = arith.constant 5.000000e-01 : f32
    %40 = vector.broadcast %cst_22 : f32 to vector<8x32xf32>
    %41 = arith.mulf %40, %39 : vector<8x32xf32>
    %cst_23 = arith.constant 5.000000e-01 : f32
    %42 = vector.broadcast %cst_23 : f32 to vector<8x32xf32>
    %43 = arith.addf %41, %42 : vector<8x32xf32>
    %44 = vector.extract_strided_slice %38 {offsets = [0, 32], sizes = [8, 32], strides = [1, 1]} : vector<8x128xf32> to vector<8x32xf32>
    %cst_24 = arith.constant 5.000000e-01 : f32
    %45 = vector.broadcast %cst_24 : f32 to vector<8x32xf32>
    %46 = arith.mulf %45, %44 : vector<8x32xf32>
    %cst_25 = arith.constant 5.000000e-01 : f32
    %47 = vector.broadcast %cst_25 : f32 to vector<8x32xf32>
    %48 = arith.addf %46, %47 : vector<8x32xf32>
    %49 = vector.extract_strided_slice %38 {offsets = [0, 64], sizes = [8, 32], strides = [1, 1]} : vector<8x128xf32> to vector<8x32xf32>
    %50 = vector.extract_strided_slice %38 {offsets = [0, 96], sizes = [8, 32], strides = [1, 1]} : vector<8x128xf32> to vector<8x32xf32>
    %cst_26 = arith.constant 5.000000e-01 : f32
    %51 = vector.broadcast %cst_26 : f32 to vector<8x32xf32>
    %52 = arith.mulf %51, %50 : vector<8x32xf32>
    %cst_27 = arith.constant 5.000000e-01 : f32
    %53 = vector.broadcast %cst_27 : f32 to vector<8x32xf32>
    %54 = arith.addf %52, %53 : vector<8x32xf32>
    %55 = arith.mulf %48, %32 : vector<8x32xf32>
    %56 = arith.mulf %43, %49 : vector<8x32xf32>
    %57 = arith.addf %55, %56 : vector<8x32xf32>
    %58 = math.tanh %57 : vector<8x32xf32>
    %59 = arith.mulf %54, %58 : vector<8x32xf32>
    %c16 = arith.constant 16 : index
    %c0_28 = arith.constant 0 : index
    %60 = vector.load %arg6[%c16, %c0_28] : memref<64x128xf32, #tpu.memory_space<vmem>>, vector<8x128xf32>
    %cst_29 = arith.constant dense<0.000000e+00> : vector<8x128xf32>
    %61 = tpu.matmul %59, %7, %cst_29 {dimension_numbers = #tpu.dot_dimension_numbers<[1], [0], [0], [1], [0, 0, 1, 1], [], []>} : vector<8x32xf32>, vector<32x128xf32>, vector<8x128xf32> -> vector<8x128xf32>
    %62 = arith.addf %60, %61 : vector<8x128xf32>
    %63 = math.tanh %62 : vector<8x128xf32>
    %64 = vector.extract_strided_slice %63 {offsets = [0, 0], sizes = [8, 32], strides = [1, 1]} : vector<8x128xf32> to vector<8x32xf32>
    %cst_30 = arith.constant 5.000000e-01 : f32
    %65 = vector.broadcast %cst_30 : f32 to vector<8x32xf32>
    %66 = arith.mulf %65, %64 : vector<8x32xf32>
    %cst_31 = arith.constant 5.000000e-01 : f32
    %67 = vector.broadcast %cst_31 : f32 to vector<8x32xf32>
    %68 = arith.addf %66, %67 : vector<8x32xf32>
    %69 = vector.extract_strided_slice %63 {offsets = [0, 32], sizes = [8, 32], strides = [1, 1]} : vector<8x128xf32> to vector<8x32xf32>
    %cst_32 = arith.constant 5.000000e-01 : f32
    %70 = vector.broadcast %cst_32 : f32 to vector<8x32xf32>
    %71 = arith.mulf %70, %69 : vector<8x32xf32>
    %cst_33 = arith.constant 5.000000e-01 : f32
    %72 = vector.broadcast %cst_33 : f32 to vector<8x32xf32>
    %73 = arith.addf %71, %72 : vector<8x32xf32>
    %74 = vector.extract_strided_slice %63 {offsets = [0, 64], sizes = [8, 32], strides = [1, 1]} : vector<8x128xf32> to vector<8x32xf32>
    %75 = vector.extract_strided_slice %63 {offsets = [0, 96], sizes = [8, 32], strides = [1, 1]} : vector<8x128xf32> to vector<8x32xf32>
    %cst_34 = arith.constant 5.000000e-01 : f32
    %76 = vector.broadcast %cst_34 : f32 to vector<8x32xf32>
    %77 = arith.mulf %76, %75 : vector<8x32xf32>
    %cst_35 = arith.constant 5.000000e-01 : f32
    %78 = vector.broadcast %cst_35 : f32 to vector<8x32xf32>
    %79 = arith.addf %77, %78 : vector<8x32xf32>
    %80 = arith.mulf %73, %57 : vector<8x32xf32>
    %81 = arith.mulf %68, %74 : vector<8x32xf32>
    %82 = arith.addf %80, %81 : vector<8x32xf32>
    %83 = math.tanh %82 : vector<8x32xf32>
    %84 = arith.mulf %79, %83 : vector<8x32xf32>
    %c24 = arith.constant 24 : index
    %c0_36 = arith.constant 0 : index
    %85 = vector.load %arg6[%c24, %c0_36] : memref<64x128xf32, #tpu.memory_space<vmem>>, vector<8x128xf32>
    %cst_37 = arith.constant dense<0.000000e+00> : vector<8x128xf32>
    %86 = tpu.matmul %84, %7, %cst_37 {dimension_numbers = #tpu.dot_dimension_numbers<[1], [0], [0], [1], [0, 0, 1, 1], [], []>} : vector<8x32xf32>, vector<32x128xf32>, vector<8x128xf32> -> vector<8x128xf32>
    %87 = arith.addf %85, %86 : vector<8x128xf32>
    %88 = math.tanh %87 : vector<8x128xf32>
    %89 = vector.extract_strided_slice %88 {offsets = [0, 0], sizes = [8, 32], strides = [1, 1]} : vector<8x128xf32> to vector<8x32xf32>
    %cst_38 = arith.constant 5.000000e-01 : f32
    %90 = vector.broadcast %cst_38 : f32 to vector<8x32xf32>
    %91 = arith.mulf %90, %89 : vector<8x32xf32>
    %cst_39 = arith.constant 5.000000e-01 : f32
    %92 = vector.broadcast %cst_39 : f32 to vector<8x32xf32>
    %93 = arith.addf %91, %92 : vector<8x32xf32>
    %94 = vector.extract_strided_slice %88 {offsets = [0, 32], sizes = [8, 32], strides = [1, 1]} : vector<8x128xf32> to vector<8x32xf32>
    %cst_40 = arith.constant 5.000000e-01 : f32
    %95 = vector.broadcast %cst_40 : f32 to vector<8x32xf32>
    %96 = arith.mulf %95, %94 : vector<8x32xf32>
    %cst_41 = arith.constant 5.000000e-01 : f32
    %97 = vector.broadcast %cst_41 : f32 to vector<8x32xf32>
    %98 = arith.addf %96, %97 : vector<8x32xf32>
    %99 = vector.extract_strided_slice %88 {offsets = [0, 64], sizes = [8, 32], strides = [1, 1]} : vector<8x128xf32> to vector<8x32xf32>
    %100 = vector.extract_strided_slice %88 {offsets = [0, 96], sizes = [8, 32], strides = [1, 1]} : vector<8x128xf32> to vector<8x32xf32>
    %cst_42 = arith.constant 5.000000e-01 : f32
    %101 = vector.broadcast %cst_42 : f32 to vector<8x32xf32>
    %102 = arith.mulf %101, %100 : vector<8x32xf32>
    %cst_43 = arith.constant 5.000000e-01 : f32
    %103 = vector.broadcast %cst_43 : f32 to vector<8x32xf32>
    %104 = arith.addf %102, %103 : vector<8x32xf32>
    %105 = arith.mulf %98, %82 : vector<8x32xf32>
    %106 = arith.mulf %93, %99 : vector<8x32xf32>
    %107 = arith.addf %105, %106 : vector<8x32xf32>
    %108 = math.tanh %107 : vector<8x32xf32>
    %109 = arith.mulf %104, %108 : vector<8x32xf32>
    %c32 = arith.constant 32 : index
    %c0_44 = arith.constant 0 : index
    %110 = vector.load %arg6[%c32, %c0_44] : memref<64x128xf32, #tpu.memory_space<vmem>>, vector<8x128xf32>
    %cst_45 = arith.constant dense<0.000000e+00> : vector<8x128xf32>
    %111 = tpu.matmul %109, %7, %cst_45 {dimension_numbers = #tpu.dot_dimension_numbers<[1], [0], [0], [1], [0, 0, 1, 1], [], []>} : vector<8x32xf32>, vector<32x128xf32>, vector<8x128xf32> -> vector<8x128xf32>
    %112 = arith.addf %110, %111 : vector<8x128xf32>
    %113 = math.tanh %112 : vector<8x128xf32>
    %114 = vector.extract_strided_slice %113 {offsets = [0, 0], sizes = [8, 32], strides = [1, 1]} : vector<8x128xf32> to vector<8x32xf32>
    %cst_46 = arith.constant 5.000000e-01 : f32
    %115 = vector.broadcast %cst_46 : f32 to vector<8x32xf32>
    %116 = arith.mulf %115, %114 : vector<8x32xf32>
    %cst_47 = arith.constant 5.000000e-01 : f32
    %117 = vector.broadcast %cst_47 : f32 to vector<8x32xf32>
    %118 = arith.addf %116, %117 : vector<8x32xf32>
    %119 = vector.extract_strided_slice %113 {offsets = [0, 32], sizes = [8, 32], strides = [1, 1]} : vector<8x128xf32> to vector<8x32xf32>
    %cst_48 = arith.constant 5.000000e-01 : f32
    %120 = vector.broadcast %cst_48 : f32 to vector<8x32xf32>
    %121 = arith.mulf %120, %119 : vector<8x32xf32>
    %cst_49 = arith.constant 5.000000e-01 : f32
    %122 = vector.broadcast %cst_49 : f32 to vector<8x32xf32>
    %123 = arith.addf %121, %122 : vector<8x32xf32>
    %124 = vector.extract_strided_slice %113 {offsets = [0, 64], sizes = [8, 32], strides = [1, 1]} : vector<8x128xf32> to vector<8x32xf32>
    %125 = vector.extract_strided_slice %113 {offsets = [0, 96], sizes = [8, 32], strides = [1, 1]} : vector<8x128xf32> to vector<8x32xf32>
    %cst_50 = arith.constant 5.000000e-01 : f32
    %126 = vector.broadcast %cst_50 : f32 to vector<8x32xf32>
    %127 = arith.mulf %126, %125 : vector<8x32xf32>
    %cst_51 = arith.constant 5.000000e-01 : f32
    %128 = vector.broadcast %cst_51 : f32 to vector<8x32xf32>
    %129 = arith.addf %127, %128 : vector<8x32xf32>
    %130 = arith.mulf %123, %107 : vector<8x32xf32>
    %131 = arith.mulf %118, %124 : vector<8x32xf32>
    %132 = arith.addf %130, %131 : vector<8x32xf32>
    %133 = math.tanh %132 : vector<8x32xf32>
    %134 = arith.mulf %129, %133 : vector<8x32xf32>
    %c40 = arith.constant 40 : index
    %c0_52 = arith.constant 0 : index
    %135 = vector.load %arg6[%c40, %c0_52] : memref<64x128xf32, #tpu.memory_space<vmem>>, vector<8x128xf32>
    %cst_53 = arith.constant dense<0.000000e+00> : vector<8x128xf32>
    %136 = tpu.matmul %134, %7, %cst_53 {dimension_numbers = #tpu.dot_dimension_numbers<[1], [0], [0], [1], [0, 0, 1, 1], [], []>} : vector<8x32xf32>, vector<32x128xf32>, vector<8x128xf32> -> vector<8x128xf32>
    %137 = arith.addf %135, %136 : vector<8x128xf32>
    %138 = math.tanh %137 : vector<8x128xf32>
    %139 = vector.extract_strided_slice %138 {offsets = [0, 0], sizes = [8, 32], strides = [1, 1]} : vector<8x128xf32> to vector<8x32xf32>
    %cst_54 = arith.constant 5.000000e-01 : f32
    %140 = vector.broadcast %cst_54 : f32 to vector<8x32xf32>
    %141 = arith.mulf %140, %139 : vector<8x32xf32>
    %cst_55 = arith.constant 5.000000e-01 : f32
    %142 = vector.broadcast %cst_55 : f32 to vector<8x32xf32>
    %143 = arith.addf %141, %142 : vector<8x32xf32>
    %144 = vector.extract_strided_slice %138 {offsets = [0, 32], sizes = [8, 32], strides = [1, 1]} : vector<8x128xf32> to vector<8x32xf32>
    %cst_56 = arith.constant 5.000000e-01 : f32
    %145 = vector.broadcast %cst_56 : f32 to vector<8x32xf32>
    %146 = arith.mulf %145, %144 : vector<8x32xf32>
    %cst_57 = arith.constant 5.000000e-01 : f32
    %147 = vector.broadcast %cst_57 : f32 to vector<8x32xf32>
    %148 = arith.addf %146, %147 : vector<8x32xf32>
    %149 = vector.extract_strided_slice %138 {offsets = [0, 64], sizes = [8, 32], strides = [1, 1]} : vector<8x128xf32> to vector<8x32xf32>
    %150 = vector.extract_strided_slice %138 {offsets = [0, 96], sizes = [8, 32], strides = [1, 1]} : vector<8x128xf32> to vector<8x32xf32>
    %cst_58 = arith.constant 5.000000e-01 : f32
    %151 = vector.broadcast %cst_58 : f32 to vector<8x32xf32>
    %152 = arith.mulf %151, %150 : vector<8x32xf32>
    %cst_59 = arith.constant 5.000000e-01 : f32
    %153 = vector.broadcast %cst_59 : f32 to vector<8x32xf32>
    %154 = arith.addf %152, %153 : vector<8x32xf32>
    %155 = arith.mulf %148, %132 : vector<8x32xf32>
    %156 = arith.mulf %143, %149 : vector<8x32xf32>
    %157 = arith.addf %155, %156 : vector<8x32xf32>
    %158 = math.tanh %157 : vector<8x32xf32>
    %159 = arith.mulf %154, %158 : vector<8x32xf32>
    %c48 = arith.constant 48 : index
    %c0_60 = arith.constant 0 : index
    %160 = vector.load %arg6[%c48, %c0_60] : memref<64x128xf32, #tpu.memory_space<vmem>>, vector<8x128xf32>
    %cst_61 = arith.constant dense<0.000000e+00> : vector<8x128xf32>
    %161 = tpu.matmul %159, %7, %cst_61 {dimension_numbers = #tpu.dot_dimension_numbers<[1], [0], [0], [1], [0, 0, 1, 1], [], []>} : vector<8x32xf32>, vector<32x128xf32>, vector<8x128xf32> -> vector<8x128xf32>
    %162 = arith.addf %160, %161 : vector<8x128xf32>
    %163 = math.tanh %162 : vector<8x128xf32>
    %164 = vector.extract_strided_slice %163 {offsets = [0, 0], sizes = [8, 32], strides = [1, 1]} : vector<8x128xf32> to vector<8x32xf32>
    %cst_62 = arith.constant 5.000000e-01 : f32
    %165 = vector.broadcast %cst_62 : f32 to vector<8x32xf32>
    %166 = arith.mulf %165, %164 : vector<8x32xf32>
    %cst_63 = arith.constant 5.000000e-01 : f32
    %167 = vector.broadcast %cst_63 : f32 to vector<8x32xf32>
    %168 = arith.addf %166, %167 : vector<8x32xf32>
    %169 = vector.extract_strided_slice %163 {offsets = [0, 32], sizes = [8, 32], strides = [1, 1]} : vector<8x128xf32> to vector<8x32xf32>
    %cst_64 = arith.constant 5.000000e-01 : f32
    %170 = vector.broadcast %cst_64 : f32 to vector<8x32xf32>
    %171 = arith.mulf %170, %169 : vector<8x32xf32>
    %cst_65 = arith.constant 5.000000e-01 : f32
    %172 = vector.broadcast %cst_65 : f32 to vector<8x32xf32>
    %173 = arith.addf %171, %172 : vector<8x32xf32>
    %174 = vector.extract_strided_slice %163 {offsets = [0, 64], sizes = [8, 32], strides = [1, 1]} : vector<8x128xf32> to vector<8x32xf32>
    %175 = vector.extract_strided_slice %163 {offsets = [0, 96], sizes = [8, 32], strides = [1, 1]} : vector<8x128xf32> to vector<8x32xf32>
    %cst_66 = arith.constant 5.000000e-01 : f32
    %176 = vector.broadcast %cst_66 : f32 to vector<8x32xf32>
    %177 = arith.mulf %176, %175 : vector<8x32xf32>
    %cst_67 = arith.constant 5.000000e-01 : f32
    %178 = vector.broadcast %cst_67 : f32 to vector<8x32xf32>
    %179 = arith.addf %177, %178 : vector<8x32xf32>
    %180 = arith.mulf %173, %157 : vector<8x32xf32>
    %181 = arith.mulf %168, %174 : vector<8x32xf32>
    %182 = arith.addf %180, %181 : vector<8x32xf32>
    %183 = math.tanh %182 : vector<8x32xf32>
    %184 = arith.mulf %179, %183 : vector<8x32xf32>
    %c56 = arith.constant 56 : index
    %c0_68 = arith.constant 0 : index
    %185 = vector.load %arg6[%c56, %c0_68] : memref<64x128xf32, #tpu.memory_space<vmem>>, vector<8x128xf32>
    %cst_69 = arith.constant dense<0.000000e+00> : vector<8x128xf32>
    %186 = tpu.matmul %184, %7, %cst_69 {dimension_numbers = #tpu.dot_dimension_numbers<[1], [0], [0], [1], [0, 0, 1, 1], [], []>} : vector<8x32xf32>, vector<32x128xf32>, vector<8x128xf32> -> vector<8x128xf32>
    %187 = arith.addf %185, %186 : vector<8x128xf32>
    %188 = math.tanh %187 : vector<8x128xf32>
    %189 = vector.extract_strided_slice %188 {offsets = [0, 0], sizes = [8, 32], strides = [1, 1]} : vector<8x128xf32> to vector<8x32xf32>
    %cst_70 = arith.constant 5.000000e-01 : f32
    %190 = vector.broadcast %cst_70 : f32 to vector<8x32xf32>
    %191 = arith.mulf %190, %189 : vector<8x32xf32>
    %cst_71 = arith.constant 5.000000e-01 : f32
    %192 = vector.broadcast %cst_71 : f32 to vector<8x32xf32>
    %193 = arith.addf %191, %192 : vector<8x32xf32>
    %194 = vector.extract_strided_slice %188 {offsets = [0, 32], sizes = [8, 32], strides = [1, 1]} : vector<8x128xf32> to vector<8x32xf32>
    %cst_72 = arith.constant 5.000000e-01 : f32
    %195 = vector.broadcast %cst_72 : f32 to vector<8x32xf32>
    %196 = arith.mulf %195, %194 : vector<8x32xf32>
    %cst_73 = arith.constant 5.000000e-01 : f32
    %197 = vector.broadcast %cst_73 : f32 to vector<8x32xf32>
    %198 = arith.addf %196, %197 : vector<8x32xf32>
    %199 = vector.extract_strided_slice %188 {offsets = [0, 64], sizes = [8, 32], strides = [1, 1]} : vector<8x128xf32> to vector<8x32xf32>
    %200 = vector.extract_strided_slice %188 {offsets = [0, 96], sizes = [8, 32], strides = [1, 1]} : vector<8x128xf32> to vector<8x32xf32>
    %cst_74 = arith.constant 5.000000e-01 : f32
    %201 = vector.broadcast %cst_74 : f32 to vector<8x32xf32>
    %202 = arith.mulf %201, %200 : vector<8x32xf32>
    %cst_75 = arith.constant 5.000000e-01 : f32
    %203 = vector.broadcast %cst_75 : f32 to vector<8x32xf32>
    %204 = arith.addf %202, %203 : vector<8x32xf32>
    %205 = arith.mulf %198, %182 : vector<8x32xf32>
    %206 = arith.mulf %193, %199 : vector<8x32xf32>
    %207 = arith.addf %205, %206 : vector<8x32xf32>
    %208 = math.tanh %207 : vector<8x32xf32>
    %209 = arith.mulf %204, %208 : vector<8x32xf32>
    %c0_76 = arith.constant 0 : index
    %c0_77 = arith.constant 0 : index
    %210 = vector.load %arg5[%c0_76, %c0_77] : memref<8x32xf32, #tpu.memory_space<vmem>>, vector<8x32xf32>
    tpu.vector_store %arg5[%c0_76, %c0_77], %209 {strides = array<i32>} : memref<8x32xf32, #tpu.memory_space<vmem>>, vector<8x32xf32>,
    return
  }
  func.func @transform_0(%arg0: i32) -> (i32, i32) {
    %c0_i32 = arith.constant 0 : i32
    %c0_i32_0 = arith.constant 0 : i32
    return %arg0, %c0_i32 : i32, i32
  }
  func.func @transform_1(%arg0: i32) -> (i32, i32) {
    %c0_i32 = arith.constant 0 : i32
    %c0_i32_0 = arith.constant 0 : i32
    %c0_i32_1 = arith.constant 0 : i32
    return %c0_i32, %c0_i32_0 : i32, i32
  }
  func.func @transform_2(%arg0: i32) -> (i32, i32) {
    %c0_i32 = arith.constant 0 : i32
    %c0_i32_0 = arith.constant 0 : i32
    %c0_i32_1 = arith.constant 0 : i32
    return %c0_i32, %c0_i32_0 : i32, i32
  }
  func.func @transform_3(%arg0: i32) -> (i32, i32) {
    %c0_i32 = arith.constant 0 : i32
    %c0_i32_0 = arith.constant 0 : i32
    %c0_i32_1 = arith.constant 0 : i32
    return %c0_i32, %c0_i32_0 : i32, i32
  }
  func.func @transform_4(%arg0: i32) -> (i32, i32) {
    %c0_i32 = arith.constant 0 : i32
    %c0_i32_0 = arith.constant 0 : i32
    return %arg0, %c0_i32 : i32, i32
  }
}

</mosaic_0001>

<llo_original>
// kernel: imu_feat_rnn1_forward.1
$region0: #{imu_feat_rnn1_forward.1}
  #allocation0 [shape = 'u32[]', space=smem, size = 0x4, offset = 0x4, fixed_abs, tag = 'smem constant byte address 0x4 - core index']
  #allocation1 [shape = 'u32[144,128]{1,0:T(1,128)}', space=vmem, size = 0x12000, scoped, tag = 'internal scratch']
  #allocation2 [shape = 'f32[64,128]{1,0:T(8,128)}', space=vmem, size = 0x8000, scoped, tag = 'scratch operand']
  %s0 = inlined_call_operand.vmem [shape: f32[64,6], index: 0, kind: input, shape index: {}]
  %s1 = inlined_call_operand.vmem [shape: f32[6,128], index: 1, kind: input, shape index: {}]
  %s2 = inlined_call_operand.vmem [shape: f32[32,128], index: 2, kind: input, shape index: {}]
  %s3 = inlined_call_operand.vmem [shape: f32[1,128], index: 3, kind: input, shape index: {}]
  %s4 = inlined_call_operand.vmem [shape: f32[8,32], index: 4, kind: output, shape index: {}]
  %s5 = sld [smem:[#allocation0]]
  $region26: #{imu_feat_rnn1_forward.1} parent=0
    _
  %s7 = ssub.s32 1, %s5
  %s8 = scalar_select 0, %s7, %s5
  // Predicated region
  $region2: #{imu_feat_rnn1_forward.1} parent=0 // pred_check
    _
  $region3: #{imu_feat_rnn1_forward.1} parent=0 // pred_check_branch
    %10 = sbr.rel (0) target = $region5
  $region4: #{imu_feat_rnn1_forward.1} parent=0 // pred_region
    _
  $region5: #{imu_feat_rnn1_forward.1} parent=0 // pred_fallthru
    _
  // Predicated region
  $region6: #{imu_feat_rnn1_forward.1} parent=0 // pred_check
    _
  $region7: #{imu_feat_rnn1_forward.1} parent=0 // pred_check_branch
    %12 = sbr.rel (0) target = $region9
  $region8: #{imu_feat_rnn1_forward.1} parent=0 // pred_region
    _
  $region9: #{imu_feat_rnn1_forward.1} parent=0 // pred_fallthru
    _
  // Predicated region
  $region10: #{imu_feat_rnn1_forward.1} parent=0 // pred_check
    _
  $region11: #{imu_feat_rnn1_forward.1} parent=0 // pred_check_branch
    %14 = sbr.rel (0) target = $region13
  $region12: #{imu_feat_rnn1_forward.1} parent=0 // pred_region
    _
  $region13: #{imu_feat_rnn1_forward.1} parent=0 // pred_fallthru
    _
  // Predicated region
  $region14: #{imu_feat_rnn1_forward.1} parent=0 // pred_check
    _
  $region15: #{imu_feat_rnn1_forward.1} parent=0 // pred_check_branch
    %16 = sbr.rel (0) target = $region17
  $region16: #{imu_feat_rnn1_forward.1} parent=0 // pred_region
    _
  $region17: #{imu_feat_rnn1_forward.1} parent=0 // pred_fallthru
    _
  %v17 = vld [vmem:[%s0] sm:$0xff]
  %v18 = vld [vmem:[%s0 + $0x8] sm:$0xff]
  %v19 = vld [vmem:[%s0 + $0x10] sm:$0xff]
  %v20 = vld [vmem:[%s0 + $0x18] sm:$0xff]
  %v21 = vld [vmem:[%s0 + $0x20] sm:$0xff]
  %v22 = vld [vmem:[%s0 + $0x28] sm:$0xff]
  %v23 = vld [vmem:[%s0 + $0x30] sm:$0xff]
  %v24 = vld [vmem:[%s0 + $0x38] sm:$0xff]
  %v25 = vld [vmem:[%s1] sm:$0x3f]
  %v26 = vld [vmem:[%s3] sm:$0x1]
  %v28 = vlaneseq
  %v29 = vshrl.u32 %v28, 7
  %v30 = vsub.s32 0, %v29
  %v31 = vrot.slane %v26, %v30
  %vm33 = vcmask 48128
  %v35 = vsel %vm33, %v17, 0
  %v38 = vsel %vm33, %v18, 0
  %v41 = vsel %vm33, %v19, 0
  %v44 = vsel %vm33, %v20, 0
  %v47 = vsel %vm33, %v21, 0
  %v50 = vsel %vm33, %v22, 0
  %v53 = vsel %vm33, %v23, 0
  %v56 = vsel %vm33, %v24, 0
  %vm58 = vcmask 1045504
  %v60 = vsel %vm58, %v25, 0
  %62 = vmatprep.subr.mxu0 0.0
  %63 = vmatpush1.msra.mxu0 %v60
  %64 = vmatprep.subr.mxu0 0.0
  %65 = vmatpush1.msra.mxu0 0.0
  %66 = vmatprep.subr.mxu0 0.0
  %67 = vmatpush1.msra.mxu0 0.0
  %68 = vmatprep.subr.mxu0 0.0
  %69 = vmatpush1.msra.mxu0 0.0
  %70 = vmatprep.subr.mxu0 0.0
  %71 = vmatpush1.msra.mxu0 0.0
  %72 = vmatprep.subr.mxu0 0.0
  %73 = vmatpush1.msra.mxu0 0.0
  %74 = vmatprep.subr.mxu0 0.0
  %75 = vmatpush1.msra.mxu0 0.0
  %76 = vmatprep.subr.mxu0 0.0
  %77 = vmatpush1.msra.mxu0 0.0
  %78 = vmatprep.subr.mxu0 0.0
  %79 = vmatpush1.msra.mxu0 0.0
  %80 = vmatprep.subr.mxu0 0.0
  %81 = vmatpush1.msra.mxu0 0.0
  %82 = vmatprep.subr.mxu0 0.0
  %83 = vmatpush1.msra.mxu0 0.0
  %84 = vmatprep.subr.mxu0 0.0
  %85 = vmatpush1.msra.mxu0 0.0
  %86 = vmatprep.subr.mxu0 0.0
  %87 = vmatpush1.msra.mxu0 0.0
  %88 = vmatprep.subr.mxu0 0.0
  %89 = vmatpush1.msra.mxu0 0.0
  %90 = vmatprep.subr.mxu0 0.0
  %91 = vmatpush1.msra.mxu0 0.0
  %92 = vmatprep.subr.mxu0 0.0
  %93 = vmatpush1.msra.mxu0 0.0
  %94 = vmatprep.subr.mxu0 0.0
  %95 = vmatpush1.msra.mxu0 0.0
  %96 = vmatprep.subr.mxu0 0.0
  %97 = vmatpush1.msra.mxu0 0.0
  %98 = vmatprep.subr.mxu0 0.0
  %99 = vmatpush1.msra.mxu0 0.0
  %100 = vmatprep.subr.mxu0 0.0
  %101 = vmatpush1.msra.mxu0 0.0
  %102 = vmatprep.subr.mxu0 0.0
  %103 = vmatpush1.msra.mxu0 0.0
  %104 = vmatprep.subr.mxu0 0.0
  %105 = vmatpush1.msra.mxu0 0.0
  %106 = vmatprep.subr.mxu0 0.0
  %107 = vmatpush1.msra.mxu0 0.0
  %108 = vmatprep.subr.mxu0 0.0
  %109 = vmatpush1.msra.mxu0 0.0
  %110 = vmatprep.subr.mxu0 0.0
  %111 = vmatpush1.msra.mxu0 0.0
  %112 = vmatprep.subr.mxu0 0.0
  %113 = vmatpush1.msra.mxu0 0.0
  %114 = vmatprep.subr.mxu0 0.0
  %115 = vmatpush1.msra.mxu0 0.0
  %116 = vmatprep.subr.mxu0 0.0
  %117 = vmatpush1.msra.mxu0 0.0
  %118 = vmatprep.subr.mxu0 0.0
  %119 = vmatpush1.msra.mxu0 0.0
  %120 = vmatprep.subr.mxu0 0.0
  %121 = vmatpush1.msra.mxu0 0.0
  %122 = vmatprep.subr.mxu0 0.0
  %123 = vmatpush1.msra.mxu0 0.0
  %124 = vmatprep.subr.mxu0 0.0
  %125 = vmatpush1.msra.mxu0 0.0
  %126 = vmatprep.mubr.f32.mxu0 0.0
  %127 = vmatmul.mubr.f32.gmra.mrb[0].mxu0 %v35
  %v128 = vpop.f32.mrb[0].mxu0
  %v129 = vadd.f32 %v31, %v128
  %v130 = vpop.f32.mrb[0].mxu0
  %131 = vmatprep.mubr.f32.mxu0 0.0
  %132 = vmatmul.mubr.f32.gmra.mrb[0].mxu0 %v38
  %v133 = vpop.f32.mrb[0].mxu0
  %v134 = vadd.f32 %v31, %v133
  %v135 = vpop.f32.mrb[0].mxu0
  %136 = vmatprep.mubr.f32.mxu0 0.0
  %137 = vmatmul.mubr.f32.gmra.mrb[0].mxu0 %v41
  %v138 = vpop.f32.mrb[0].mxu0
  %v139 = vadd.f32 %v31, %v138
  %v140 = vpop.f32.mrb[0].mxu0
  %141 = vmatprep.mubr.f32.mxu0 0.0
  %142 = vmatmul.mubr.f32.gmra.mrb[0].mxu0 %v44
  %v143 = vpop.f32.mrb[0].mxu0
  %v144 = vadd.f32 %v31, %v143
  %v145 = vpop.f32.mrb[0].mxu0
  %146 = vmatprep.mubr.f32.mxu0 0.0
  %147 = vmatmul.mubr.f32.gmra.mrb[0].mxu0 %v47
  %v148 = vpop.f32.mrb[0].mxu0
  %v149 = vadd.f32 %v31, %v148
  %v150 = vpop.f32.mrb[0].mxu0
  %151 = vmatprep.mubr.f32.mxu0 0.0
  %152 = vmatmul.mubr.f32.gmra.mrb[0].mxu0 %v50
  %v153 = vpop.f32.mrb[0].mxu0
  %v154 = vadd.f32 %v31, %v153
  %v155 = vpop.f32.mrb[0].mxu0
  %156 = vmatprep.mubr.f32.mxu0 0.0
  %157 = vmatmul.mubr.f32.gmra.mrb[0].mxu0 %v53
  %v158 = vpop.f32.mrb[0].mxu0
  %v159 = vadd.f32 %v31, %v158
  %v160 = vpop.f32.mrb[0].mxu0
  %161 = vmatprep.mubr.f32.mxu0 0.0
  %162 = vmatmul.mubr.f32.gmra.mrb[0].mxu0 %v56
  %v163 = vpop.f32.mrb[0].mxu0
  %v164 = vadd.f32 %v31, %v163
  %v165 = vpop.f32.mrb[0].mxu0
  %166 = vdwg.mxu0
  %167 = vst [vmem:[#allocation2] sm:$0xff] %v129
  %168 = vst [vmem:[#allocation2 + $0x8] sm:$0xff] %v134
  %169 = vst [vmem:[#allocation2 + $0x10] sm:$0xff] %v139
  %170 = vst [vmem:[#allocation2 + $0x18] sm:$0xff] %v144
  %171 = vst [vmem:[#allocation2 + $0x20] sm:$0xff] %v149
  %172 = vst [vmem:[#allocation2 + $0x28] sm:$0xff] %v154
  %173 = vst [vmem:[#allocation2 + $0x30] sm:$0xff] %v159
  %174 = vst [vmem:[#allocation2 + $0x38] sm:$0xff] %v164
  %v175 = vld [vmem:[%s2] sm:$0xff]
  %v176 = vld [vmem:[%s2 + $0x8] sm:$0xff]
  %v177 = vld [vmem:[%s2 + $0x10] sm:$0xff]
  %v178 = vld [vmem:[%s2 + $0x18] sm:$0xff]
  %v179 = vld [vmem:[#allocation2] sm:$0xff]
  %vm180 = vcmask 261120
  %v182 = vsel %vm180, 0.0, 0
  %184 = vmatprep.subr.mxu0 0.0
  %185 = vmatpush1.msra.mxu0 %v175
  %186 = vmatprep.subr.mxu0 0.0
  %187 = vmatpush1.msra.mxu0 %v176
  %188 = vmatprep.subr.mxu0 0.0
  %189 = vmatpush1.msra.mxu0 %v177
  %190 = vmatprep.subr.mxu0 0.0
  %191 = vmatpush1.msra.mxu0 %v178
  %192 = vmatprep.subr.mxu0 0.0
  %193 = vmatpush1.msra.mxu0 0.0
  %194 = vmatprep.subr.mxu0 0.0
  %195 = vmatpush1.msra.mxu0 0.0
  %196 = vmatprep.subr.mxu0 0.0
  %197 = vmatpush1.msra.mxu0 0.0
  %198 = vmatprep.subr.mxu0 0.0
  %199 = vmatpush1.msra.mxu0 0.0
  %200 = vmatprep.subr.mxu0 0.0
  %201 = vmatpush1.msra.mxu0 0.0
  %202 = vmatprep.subr.mxu0 0.0
  %203 = vmatpush1.msra.mxu0 0.0
  %204 = vmatprep.subr.mxu0 0.0
  %205 = vmatpush1.msra.mxu0 0.0
  %206 = vmatprep.subr.mxu0 0.0
  %207 = vmatpush1.msra.mxu0 0.0
  %208 = vmatprep.subr.mxu0 0.0
  %209 = vmatpush1.msra.mxu0 0.0
  %210 = vmatprep.subr.mxu0 0.0
  %211 = vmatpush1.msra.mxu0 0.0
  %212 = vmatprep.subr.mxu0 0.0
  %213 = vmatpush1.msra.mxu0 0.0
  %214 = vmatprep.subr.mxu0 0.0
  %215 = vmatpush1.msra.mxu0 0.0
  %216 = vmatprep.subr.mxu0 0.0
  %217 = vmatpush1.msra.mxu0 0.0
  %218 = vmatprep.subr.mxu0 0.0
  %219 = vmatpush1.msra.mxu0 0.0
  %220 = vmatprep.subr.mxu0 0.0
  %221 = vmatpush1.msra.mxu0 0.0
  %222 = vmatprep.subr.mxu0 0.0
  %223 = vmatpush1.msra.mxu0 0.0
  %224 = vmatprep.subr.mxu0 0.0
  %225 = vmatpush1.msra.mxu0 0.0
  %226 = vmatprep.subr.mxu0 0.0
  %227 = vmatpush1.msra.mxu0 0.0
  %228 = vmatprep.subr.mxu0 0.0
  %229 = vmatpush1.msra.mxu0 0.0
  %230 = vmatprep.subr.mxu0 0.0
  %231 = vmatpush1.msra.mxu0 0.0
  %232 = vmatprep.subr.mxu0 0.0
  %233 = vmatpush1.msra.mxu0 0.0
  %234 = vmatprep.subr.mxu0 0.0
  %235 = vmatpush1.msra.mxu0 0.0
  %236 = vmatprep.subr.mxu0 0.0
  %237 = vmatpush1.msra.mxu0 0.0
  %238 = vmatprep.subr.mxu0 0.0
  %239 = vmatpush1.msra.mxu0 0.0
  %240 = vmatprep.subr.mxu0 0.0
  %241 = vmatpush1.msra.mxu0 0.0
  %242 = vmatprep.subr.mxu0 0.0
  %243 = vmatpush1.msra.mxu0 0.0
  %244 = vmatprep.subr.mxu0 0.0
  %245 = vmatpush1.msra.mxu0 0.0
  %246 = vmatprep.subr.mxu0 0.0
  %247 = vmatpush1.msra.mxu0 0.0
  %248 = vmatprep.mubr.f32.mxu0 0.0
  %249 = vmatmul.mubr.f32.gmra.mrb[0].mxu0 %v182
  %v250 = vpop.f32.mrb[0].mxu0
  %v251 = vadd.f32 0.0, %v250
  %v252 = vpop.f32.mrb[0].mxu0
  %253 = vdwg.mxu0
  %v254 = vadd.f32 %v179, %v251
  %v255 = vtanh.pop %v254
  %v256 = vmul.f32 %v255, 0.5
  %v257 = vadd.f32 %v256, 0.5
  %v258 = vmul.f32 %v257, 0.0
  %260 = vrot.lane.b32.xlu0 %v255, 64
  %v261 = vpop.permute.xlu0 %260
  %v263 = vmul.f32 %v257, %v261
  %265 = vrot.lane.b32.xlu0 %v263, 32
  %v266 = vpop.permute.xlu0 %265
  %v268 = vadd.f32 %v258, %v266
  %v269 = vtanh.pop %v268
  %271 = vrot.lane.b32.xlu0 %v269, 64
  %v272 = vpop.permute.xlu0 %271
  %v274 = vmul.f32 %v257, %v272
  %v275 = vld [vmem:[#allocation2 + $0x8] sm:$0xff]
  %277 = vrot.lane.b32.xlu0 %v274, 32
  %v278 = vpop.permute.xlu0 %277
  %v279 = vsel %vm180, %v278, 0
  %281 = vmatprep.subr.mxu0 0.0
  %282 = vmatpush1.msra.mxu0 %v175
  %283 = vmatprep.subr.mxu0 0.0
  %284 = vmatpush1.msra.mxu0 %v176
  %285 = vmatprep.subr.mxu0 0.0
  %286 = vmatpush1.msra.mxu0 %v177
  %287 = vmatprep.subr.mxu0 0.0
  %288 = vmatpush1.msra.mxu0 %v178
  %289 = vmatprep.subr.mxu0 0.0
  %290 = vmatpush1.msra.mxu0 0.0
  %291 = vmatprep.subr.mxu0 0.0
  %292 = vmatpush1.msra.mxu0 0.0
  %293 = vmatprep.subr.mxu0 0.0
  %294 = vmatpush1.msra.mxu0 0.0
  %295 = vmatprep.subr.mxu0 0.0
  %296 = vmatpush1.msra.mxu0 0.0
  %297 = vmatprep.subr.mxu0 0.0
  %298 = vmatpush1.msra.mxu0 0.0
  %299 = vmatprep.subr.mxu0 0.0
  %300 = vmatpush1.msra.mxu0 0.0
  %301 = vmatprep.subr.mxu0 0.0
  %302 = vmatpush1.msra.mxu0 0.0
  %303 = vmatprep.subr.mxu0 0.0
  %304 = vmatpush1.msra.mxu0 0.0
  %305 = vmatprep.subr.mxu0 0.0
  %306 = vmatpush1.msra.mxu0 0.0
  %307 = vmatprep.subr.mxu0 0.0
  %308 = vmatpush1.msra.mxu0 0.0
  %309 = vmatprep.subr.mxu0 0.0
  %310 = vmatpush1.msra.mxu0 0.0
  %311 = vmatprep.subr.mxu0 0.0
  %312 = vmatpush1.msra.mxu0 0.0
  %313 = vmatprep.subr.mxu0 0.0
  %314 = vmatpush1.msra.mxu0 0.0
  %315 = vmatprep.subr.mxu0 0.0
  %316 = vmatpush1.msra.mxu0 0.0
  %317 = vmatprep.subr.mxu0 0.0
  %318 = vmatpush1.msra.mxu0 0.0
  %319 = vmatprep.subr.mxu0 0.0
  %320 = vmatpush1.msra.mxu0 0.0
  %321 = vmatprep.subr.mxu0 0.0
  %322 = vmatpush1.msra.mxu0 0.0
  %323 = vmatprep.subr.mxu0 0.0
  %324 = vmatpush1.msra.mxu0 0.0
  %325 = vmatprep.subr.mxu0 0.0
  %326 = vmatpush1.msra.mxu0 0.0
  %327 = vmatprep.subr.mxu0 0.0
  %328 = vmatpush1.msra.mxu0 0.0
  %329 = vmatprep.subr.mxu0 0.0
  %330 = vmatpush1.msra.mxu0 0.0
  %331 = vmatprep.subr.mxu0 0.0
  %332 = vmatpush1.msra.mxu0 0.0
  %333 = vmatprep.subr.mxu0 0.0
  %334 = vmatpush1.msra.mxu0 0.0
  %335 = vmatprep.subr.mxu0 0.0
  %336 = vmatpush1.msra.mxu0 0.0
  %337 = vmatprep.subr.mxu0 0.0
  %338 = vmatpush1.msra.mxu0 0.0
  %339 = vmatprep.subr.mxu0 0.0
  %340 = vmatpush1.msra.mxu0 0.0
  %341 = vmatprep.subr.mxu0 0.0
  %342 = vmatpush1.msra.mxu0 0.0
  %343 = vmatprep.subr.mxu0 0.0
  %344 = vmatpush1.msra.mxu0 0.0
  %345 = vmatprep.mubr.f32.mxu0 0.0
  %346 = vmatmul.mubr.f32.gmra.mrb[0].mxu0 %v279
  %v347 = vpop.f32.mrb[0].mxu0
  %v348 = vadd.f32 0.0, %v347
  %v349 = vpop.f32.mrb[0].mxu0
  %350 = vdwg.mxu0
  %v351 = vadd.f32 %v275, %v348
  %v352 = vtanh.pop %v351
  %v353 = vmul.f32 %v352, 0.5
  %v354 = vadd.f32 %v353, 0.5
  %v355 = vmul.f32 %v354, %v268
  %357 = vrot.lane.b32.xlu0 %v352, 64
  %v358 = vpop.permute.xlu0 %357
  %v360 = vmul.f32 %v354, %v358
  %362 = vrot.lane.b32.xlu0 %v360, 32
  %v363 = vpop.permute.xlu0 %362
  %v365 = vadd.f32 %v355, %v363
  %v366 = vtanh.pop %v365
  %368 = vrot.lane.b32.xlu0 %v366, 64
  %v369 = vpop.permute.xlu0 %368
  %v371 = vmul.f32 %v354, %v369
  %v372 = vld [vmem:[#allocation2 + $0x10] sm:$0xff]
  %374 = vrot.lane.b32.xlu0 %v371, 32
  %v375 = vpop.permute.xlu0 %374
  %v376 = vsel %vm180, %v375, 0
  %378 = vmatprep.subr.mxu0 0.0
  %379 = vmatpush1.msra.mxu0 %v175
  %380 = vmatprep.subr.mxu0 0.0
  %381 = vmatpush1.msra.mxu0 %v176
  %382 = vmatprep.subr.mxu0 0.0
  %383 = vmatpush1.msra.mxu0 %v177
  %384 = vmatprep.subr.mxu0 0.0
  %385 = vmatpush1.msra.mxu0 %v178
  %386 = vmatprep.subr.mxu0 0.0
  %387 = vmatpush1.msra.mxu0 0.0
  %388 = vmatprep.subr.mxu0 0.0
  %389 = vmatpush1.msra.mxu0 0.0
  %390 = vmatprep.subr.mxu0 0.0
  %391 = vmatpush1.msra.mxu0 0.0
  %392 = vmatprep.subr.mxu0 0.0
  %393 = vmatpush1.msra.mxu0 0.0
  %394 = vmatprep.subr.mxu0 0.0
  %395 = vmatpush1.msra.mxu0 0.0
  %396 = vmatprep.subr.mxu0 0.0
  %397 = vmatpush1.msra.mxu0 0.0
  %398 = vmatprep.subr.mxu0 0.0
  %399 = vmatpush1.msra.mxu0 0.0
  %400 = vmatprep.subr.mxu0 0.0
  %401 = vmatpush1.msra.mxu0 0.0
  %402 = vmatprep.subr.mxu0 0.0
  %403 = vmatpush1.msra.mxu0 0.0
  %404 = vmatprep.subr.mxu0 0.0
  %405 = vmatpush1.msra.mxu0 0.0
  %406 = vmatprep.subr.mxu0 0.0
  %407 = vmatpush1.msra.mxu0 0.0
  %408 = vmatprep.subr.mxu0 0.0
  %409 = vmatpush1.msra.mxu0 0.0
  %410 = vmatprep.subr.mxu0 0.0
  %411 = vmatpush1.msra.mxu0 0.0
  %412 = vmatprep.subr.mxu0 0.0
  %413 = vmatpush1.msra.mxu0 0.0
  %414 = vmatprep.subr.mxu0 0.0
  %415 = vmatpush1.msra.mxu0 0.0
  %416 = vmatprep.subr.mxu0 0.0
  %417 = vmatpush1.msra.mxu0 0.0
  %418 = vmatprep.subr.mxu0 0.0
  %419 = vmatpush1.msra.mxu0 0.0
  %420 = vmatprep.subr.mxu0 0.0
  %421 = vmatpush1.msra.mxu0 0.0
  %422 = vmatprep.subr.mxu0 0.0
  %423 = vmatpush1.msra.mxu0 0.0
  %424 = vmatprep.subr.mxu0 0.0
  %425 = vmatpush1.msra.mxu0 0.0
  %426 = vmatprep.subr.mxu0 0.0
  %427 = vmatpush1.msra.mxu0 0.0
  %428 = vmatprep.subr.mxu0 0.0
  %429 = vmatpush1.msra.mxu0 0.0
  %430 = vmatprep.subr.mxu0 0.0
  %431 = vmatpush1.msra.mxu0 0.0
  %432 = vmatprep.subr.mxu0 0.0
  %433 = vmatpush1.msra.mxu0 0.0
  %434 = vmatprep.subr.mxu0 0.0
  %435 = vmatpush1.msra.mxu0 0.0
  %436 = vmatprep.subr.mxu0 0.0
  %437 = vmatpush1.msra.mxu0 0.0
  %438 = vmatprep.subr.mxu0 0.0
  %439 = vmatpush1.msra.mxu0 0.0
  %440 = vmatprep.subr.mxu0 0.0
  %441 = vmatpush1.msra.mxu0 0.0
  %442 = vmatprep.mubr.f32.mxu0 0.0
  %443 = vmatmul.mubr.f32.gmra.mrb[0].mxu0 %v376
  %v444 = vpop.f32.mrb[0].mxu0
  %v445 = vadd.f32 0.0, %v444
  %v446 = vpop.f32.mrb[0].mxu0
  %447 = vdwg.mxu0
  %v448 = vadd.f32 %v372, %v445
  %v449 = vtanh.pop %v448
  %v450 = vmul.f32 %v449, 0.5
  %v451 = vadd.f32 %v450, 0.5
  %v452 = vmul.f32 %v451, %v365
  %454 = vrot.lane.b32.xlu0 %v449, 64
  %v455 = vpop.permute.xlu0 %454
  %v457 = vmul.f32 %v451, %v455
  %459 = vrot.lane.b32.xlu0 %v457, 32
  %v460 = vpop.permute.xlu0 %459
  %v462 = vadd.f32 %v452, %v460
  %v463 = vtanh.pop %v462
  %465 = vrot.lane.b32.xlu0 %v463, 64
  %v466 = vpop.permute.xlu0 %465
  %v468 = vmul.f32 %v451, %v466
  %v469 = vld [vmem:[#allocation2 + $0x18] sm:$0xff]
  %471 = vrot.lane.b32.xlu0 %v468, 32
  %v472 = vpop.permute.xlu0 %471
  %v473 = vsel %vm180, %v472, 0
  %475 = vmatprep.subr.mxu0 0.0
  %476 = vmatpush1.msra.mxu0 %v175
  %477 = vmatprep.subr.mxu0 0.0
  %478 = vmatpush1.msra.mxu0 %v176
  %479 = vmatprep.subr.mxu0 0.0
  %480 = vmatpush1.msra.mxu0 %v177
  %481 = vmatprep.subr.mxu0 0.0
  %482 = vmatpush1.msra.mxu0 %v178
  %483 = vmatprep.subr.mxu0 0.0
  %484 = vmatpush1.msra.mxu0 0.0
  %485 = vmatprep.subr.mxu0 0.0
  %486 = vmatpush1.msra.mxu0 0.0
  %487 = vmatprep.subr.mxu0 0.0
  %488 = vmatpush1.msra.mxu0 0.0
  %489 = vmatprep.subr.mxu0 0.0
  %490 = vmatpush1.msra.mxu0 0.0
  %491 = vmatprep.subr.mxu0 0.0
  %492 = vmatpush1.msra.mxu0 0.0
  %493 = vmatprep.subr.mxu0 0.0
  %494 = vmatpush1.msra.mxu0 0.0
  %495 = vmatprep.subr.mxu0 0.0
  %496 = vmatpush1.msra.mxu0 0.0
  %497 = vmatprep.subr.mxu0 0.0
  %498 = vmatpush1.msra.mxu0 0.0
  %499 = vmatprep.subr.mxu0 0.0
  %500 = vmatpush1.msra.mxu0 0.0
  %501 = vmatprep.subr.mxu0 0.0
  %502 = vmatpush1.msra.mxu0 0.0
  %503 = vmatprep.subr.mxu0 0.0
  %504 = vmatpush1.msra.mxu0 0.0
  %505 = vmatprep.subr.mxu0 0.0
  %506 = vmatpush1.msra.mxu0 0.0
  %507 = vmatprep.subr.mxu0 0.0
  %508 = vmatpush1.msra.mxu0 0.0
  %509 = vmatprep.subr.mxu0 0.0
  %510 = vmatpush1.msra.mxu0 0.0
  %511 = vmatprep.subr.mxu0 0.0
  %512 = vmatpush1.msra.mxu0 0.0
  %513 = vmatprep.subr.mxu0 0.0
  %514 = vmatpush1.msra.mxu0 0.0
  %515 = vmatprep.subr.mxu0 0.0
  %516 = vmatpush1.msra.mxu0 0.0
  %517 = vmatprep.subr.mxu0 0.0
  %518 = vmatpush1.msra.mxu0 0.0
  %519 = vmatprep.subr.mxu0 0.0
  %520 = vmatpush1.msra.mxu0 0.0
  %521 = vmatprep.subr.mxu0 0.0
  %522 = vmatpush1.msra.mxu0 0.0
  %523 = vmatprep.subr.mxu0 0.0
  %524 = vmatpush1.msra.mxu0 0.0
  %525 = vmatprep.subr.mxu0 0.0
  %526 = vmatpush1.msra.mxu0 0.0
  %527 = vmatprep.subr.mxu0 0.0
  %528 = vmatpush1.msra.mxu0 0.0
  %529 = vmatprep.subr.mxu0 0.0
  %530 = vmatpush1.msra.mxu0 0.0
  %531 = vmatprep.subr.mxu0 0.0
  %532 = vmatpush1.msra.mxu0 0.0
  %533 = vmatprep.subr.mxu0 0.0
  %534 = vmatpush1.msra.mxu0 0.0
  %535 = vmatprep.subr.mxu0 0.0
  %536 = vmatpush1.msra.mxu0 0.0
  %537 = vmatprep.subr.mxu0 0.0
  %538 = vmatpush1.msra.mxu0 0.0
  %539 = vmatprep.mubr.f32.mxu0 0.0
  %540 = vmatmul.mubr.f32.gmra.mrb[0].mxu0 %v473
  %v541 = vpop.f32.mrb[0].mxu0
  %v542 = vadd.f32 0.0, %v541
  %v543 = vpop.f32.mrb[0].mxu0
  %544 = vdwg.mxu0
  %v545 = vadd.f32 %v469, %v542
  %v546 = vtanh.pop %v545
  %v547 = vmul.f32 %v546, 0.5
  %v548 = vadd.f32 %v547, 0.5
  %v549 = vmul.f32 %v548, %v462
  %551 = vrot.lane.b32.xlu0 %v546, 64
  %v552 = vpop.permute.xlu0 %551
  %v554 = vmul.f32 %v548, %v552
  %556 = vrot.lane.b32.xlu0 %v554, 32
  %v557 = vpop.permute.xlu0 %556
  %v559 = vadd.f32 %v549, %v557
  %v560 = vtanh.pop %v559
  %562 = vrot.lane.b32.xlu0 %v560, 64
  %v563 = vpop.permute.xlu0 %562
  %v565 = vmul.f32 %v548, %v563
  %v566 = vld [vmem:[#allocation2 + $0x20] sm:$0xff]
  %568 = vrot.lane.b32.xlu0 %v565, 32
  %v569 = vpop.permute.xlu0 %568
  %v570 = vsel %vm180, %v569, 0
  %572 = vmatprep.subr.mxu0 0.0
  %573 = vmatpush1.msra.mxu0 %v175
  %574 = vmatprep.subr.mxu0 0.0
  %575 = vmatpush1.msra.mxu0 %v176
  %576 = vmatprep.subr.mxu0 0.0
  %577 = vmatpush1.msra.mxu0 %v177
  %578 = vmatprep.subr.mxu0 0.0
  %579 = vmatpush1.msra.mxu0 %v178
  %580 = vmatprep.subr.mxu0 0.0
  %581 = vmatpush1.msra.mxu0 0.0
  %582 = vmatprep.subr.mxu0 0.0
  %583 = vmatpush1.msra.mxu0 0.0
  %584 = vmatprep.subr.mxu0 0.0
  %585 = vmatpush1.msra.mxu0 0.0
  %586 = vmatprep.subr.mxu0 0.0
  %587 = vmatpush1.msra.mxu0 0.0
  %588 = vmatprep.subr.mxu0 0.0
  %589 = vmatpush1.msra.mxu0 0.0
  %590 = vmatprep.subr.mxu0 0.0
  %591 = vmatpush1.msra.mxu0 0.0
  %592 = vmatprep.subr.mxu0 0.0
  %593 = vmatpush1.msra.mxu0 0.0
  %594 = vmatprep.subr.mxu0 0.0
  %595 = vmatpush1.msra.mxu0 0.0
  %596 = vmatprep.subr.mxu0 0.0
  %597 = vmatpush1.msra.mxu0 0.0
  %598 = vmatprep.subr.mxu0 0.0
  %599 = vmatpush1.msra.mxu0 0.0
  %600 = vmatprep.subr.mxu0 0.0
  %601 = vmatpush1.msra.mxu0 0.0
  %602 = vmatprep.subr.mxu0 0.0
  %603 = vmatpush1.msra.mxu0 0.0
  %604 = vmatprep.subr.mxu0 0.0
  %605 = vmatpush1.msra.mxu0 0.0
  %606 = vmatprep.subr.mxu0 0.0
  %607 = vmatpush1.msra.mxu0 0.0
  %608 = vmatprep.subr.mxu0 0.0
  %609 = vmatpush1.msra.mxu0 0.0
  %610 = vmatprep.subr.mxu0 0.0
  %611 = vmatpush1.msra.mxu0 0.0
  %612 = vmatprep.subr.mxu0 0.0
  %613 = vmatpush1.msra.mxu0 0.0
  %614 = vmatprep.subr.mxu0 0.0
  %615 = vmatpush1.msra.mxu0 0.0
  %616 = vmatprep.subr.mxu0 0.0
  %617 = vmatpush1.msra.mxu0 0.0
  %618 = vmatprep.subr.mxu0 0.0
  %619 = vmatpush1.msra.mxu0 0.0
  %620 = vmatprep.subr.mxu0 0.0
  %621 = vmatpush1.msra.mxu0 0.0
  %622 = vmatprep.subr.mxu0 0.0
  %623 = vmatpush1.msra.mxu0 0.0
  %624 = vmatprep.subr.mxu0 0.0
  %625 = vmatpush1.msra.mxu0 0.0
  %626 = vmatprep.subr.mxu0 0.0
  %627 = vmatpush1.msra.mxu0 0.0
  %628 = vmatprep.subr.mxu0 0.0
  %629 = vmatpush1.msra.mxu0 0.0
  %630 = vmatprep.subr.mxu0 0.0
  %631 = vmatpush1.msra.mxu0 0.0
  %632 = vmatprep.subr.mxu0 0.0
  %633 = vmatpush1.msra.mxu0 0.0
  %634 = vmatprep.subr.mxu0 0.0
  %635 = vmatpush1.msra.mxu0 0.0
  %636 = vmatprep.mubr.f32.mxu0 0.0
  %637 = vmatmul.mubr.f32.gmra.mrb[0].mxu0 %v570
  %v638 = vpop.f32.mrb[0].mxu0
  %v639 = vadd.f32 0.0, %v638
  %v640 = vpop.f32.mrb[0].mxu0
  %641 = vdwg.mxu0
  %v642 = vadd.f32 %v566, %v639
  %v643 = vtanh.pop %v642
  %v644 = vmul.f32 %v643, 0.5
  %v645 = vadd.f32 %v644, 0.5
  %v646 = vmul.f32 %v645, %v559
  %648 = vrot.lane.b32.xlu0 %v643, 64
  %v649 = vpop.permute.xlu0 %648
  %v651 = vmul.f32 %v645, %v649
  %653 = vrot.lane.b32.xlu0 %v651, 32
  %v654 = vpop.permute.xlu0 %653
  %v656 = vadd.f32 %v646, %v654
  %v657 = vtanh.pop %v656
  %659 = vrot.lane.b32.xlu0 %v657, 64
  %v660 = vpop.permute.xlu0 %659
  %v662 = vmul.f32 %v645, %v660
  %v663 = vld [vmem:[#allocation2 + $0x28] sm:$0xff]
  %665 = vrot.lane.b32.xlu0 %v662, 32
  %v666 = vpop.permute.xlu0 %665
  %v667 = vsel %vm180, %v666, 0
  %669 = vmatprep.subr.mxu0 0.0
  %670 = vmatpush1.msra.mxu0 %v175
  %671 = vmatprep.subr.mxu0 0.0
  %672 = vmatpush1.msra.mxu0 %v176
  %673 = vmatprep.subr.mxu0 0.0
  %674 = vmatpush1.msra.mxu0 %v177
  %675 = vmatprep.subr.mxu0 0.0
  %676 = vmatpush1.msra.mxu0 %v178
  %677 = vmatprep.subr.mxu0 0.0
  %678 = vmatpush1.msra.mxu0 0.0
  %679 = vmatprep.subr.mxu0 0.0
  %680 = vmatpush1.msra.mxu0 0.0
  %681 = vmatprep.subr.mxu0 0.0
  %682 = vmatpush1.msra.mxu0 0.0
  %683 = vmatprep.subr.mxu0 0.0
  %684 = vmatpush1.msra.mxu0 0.0
  %685 = vmatprep.subr.mxu0 0.0
  %686 = vmatpush1.msra.mxu0 0.0
  %687 = vmatprep.subr.mxu0 0.0
  %688 = vmatpush1.msra.mxu0 0.0
  %689 = vmatprep.subr.mxu0 0.0
  %690 = vmatpush1.msra.mxu0 0.0
  %691 = vmatprep.subr.mxu0 0.0
  %692 = vmatpush1.msra.mxu0 0.0
  %693 = vmatprep.subr.mxu0 0.0
  %694 = vmatpush1.msra.mxu0 0.0
  %695 = vmatprep.subr.mxu0 0.0
  %696 = vmatpush1.msra.mxu0 0.0
  %697 = vmatprep.subr.mxu0 0.0
  %698 = vmatpush1.msra.mxu0 0.0
  %699 = vmatprep.subr.mxu0 0.0
  %700 = vmatpush1.msra.mxu0 0.0
  %701 = vmatprep.subr.mxu0 0.0
  %702 = vmatpush1.msra.mxu0 0.0
  %703 = vmatprep.subr.mxu0 0.0
  %704 = vmatpush1.msra.mxu0 0.0
  %705 = vmatprep.subr.mxu0 0.0
  %706 = vmatpush1.msra.mxu0 0.0
  %707 = vmatprep.subr.mxu0 0.0
  %708 = vmatpush1.msra.mxu0 0.0
  %709 = vmatprep.subr.mxu0 0.0
  %710 = vmatpush1.msra.mxu0 0.0
  %711 = vmatprep.subr.mxu0 0.0
  %712 = vmatpush1.msra.mxu0 0.0
  %713 = vmatprep.subr.mxu0 0.0
  %714 = vmatpush1.msra.mxu0 0.0
  %715 = vmatprep.subr.mxu0 0.0
  %716 = vmatpush1.msra.mxu0 0.0
  %717 = vmatprep.subr.mxu0 0.0
  %718 = vmatpush1.msra.mxu0 0.0
  %719 = vmatprep.subr.mxu0 0.0
  %720 = vmatpush1.msra.mxu0 0.0
  %721 = vmatprep.subr.mxu0 0.0
  %722 = vmatpush1.msra.mxu0 0.0
  %723 = vmatprep.subr.mxu0 0.0
  %724 = vmatpush1.msra.mxu0 0.0
  %725 = vmatprep.subr.mxu0 0.0
  %726 = vmatpush1.msra.mxu0 0.0
  %727 = vmatprep.subr.mxu0 0.0
  %728 = vmatpush1.msra.mxu0 0.0
  %729 = vmatprep.subr.mxu0 0.0
  %730 = vmatpush1.msra.mxu0 0.0
  %731 = vmatprep.subr.mxu0 0.0
  %732 = vmatpush1.msra.mxu0 0.0
  %733 = vmatprep.mubr.f32.mxu0 0.0
  %734 = vmatmul.mubr.f32.gmra.mrb[0].mxu0 %v667
  %v735 = vpop.f32.mrb[0].mxu0
  %v736 = vadd.f32 0.0, %v735
  %v737 = vpop.f32.mrb[0].mxu0
  %738 = vdwg.mxu0
  %v739 = vadd.f32 %v663, %v736
  %v740 = vtanh.pop %v739
  %v741 = vmul.f32 %v740, 0.5
  %v742 = vadd.f32 %v741, 0.5
  %v743 = vmul.f32 %v742, %v656
  %745 = vrot.lane.b32.xlu0 %v740, 64
  %v746 = vpop.permute.xlu0 %745
  %v748 = vmul.f32 %v742, %v746
  %750 = vrot.lane.b32.xlu0 %v748, 32
  %v751 = vpop.permute.xlu0 %750
  %v753 = vadd.f32 %v743, %v751
  %v754 = vtanh.pop %v753
  %756 = vrot.lane.b32.xlu0 %v754, 64
  %v757 = vpop.permute.xlu0 %756
  %v759 = vmul.f32 %v742, %v757
  %v760 = vld [vmem:[#allocation2 + $0x30] sm:$0xff]
  %762 = vrot.lane.b32.xlu0 %v759, 32
  %v763 = vpop.permute.xlu0 %762
  %v764 = vsel %vm180, %v763, 0
  %766 = vmatprep.subr.mxu0 0.0
  %767 = vmatpush1.msra.mxu0 %v175
  %768 = vmatprep.subr.mxu0 0.0
  %769 = vmatpush1.msra.mxu0 %v176
  %770 = vmatprep.subr.mxu0 0.0
  %771 = vmatpush1.msra.mxu0 %v177
  %772 = vmatprep.subr.mxu0 0.0
  %773 = vmatpush1.msra.mxu0 %v178
  %774 = vmatprep.subr.mxu0 0.0
  %775 = vmatpush1.msra.mxu0 0.0
  %776 = vmatprep.subr.mxu0 0.0
  %777 = vmatpush1.msra.mxu0 0.0
  %778 = vmatprep.subr.mxu0 0.0
  %779 = vmatpush1.msra.mxu0 0.0
  %780 = vmatprep.subr.mxu0 0.0
  %781 = vmatpush1.msra.mxu0 0.0
  %782 = vmatprep.subr.mxu0 0.0
  %783 = vmatpush1.msra.mxu0 0.0
  %784 = vmatprep.subr.mxu0 0.0
  %785 = vmatpush1.msra.mxu0 0.0
  %786 = vmatprep.subr.mxu0 0.0
  %787 = vmatpush1.msra.mxu0 0.0
  %788 = vmatprep.subr.mxu0 0.0
  %789 = vmatpush1.msra.mxu0 0.0
  %790 = vmatprep.subr.mxu0 0.0
  %791 = vmatpush1.msra.mxu0 0.0
  %792 = vmatprep.subr.mxu0 0.0
  %793 = vmatpush1.msra.mxu0 0.0
  %794 = vmatprep.subr.mxu0 0.0
  %795 = vmatpush1.msra.mxu0 0.0
  %796 = vmatprep.subr.mxu0 0.0
  %797 = vmatpush1.msra.mxu0 0.0
  %798 = vmatprep.subr.mxu0 0.0
  %799 = vmatpush1.msra.mxu0 0.0
  %800 = vmatprep.subr.mxu0 0.0
  %801 = vmatpush1.msra.mxu0 0.0
  %802 = vmatprep.subr.mxu0 0.0
  %803 = vmatpush1.msra.mxu0 0.0
  %804 = vmatprep.subr.mxu0 0.0
  %805 = vmatpush1.msra.mxu0 0.0
  %806 = vmatprep.subr.mxu0 0.0
  %807 = vmatpush1.msra.mxu0 0.0
  %808 = vmatprep.subr.mxu0 0.0
  %809 = vmatpush1.msra.mxu0 0.0
  %810 = vmatprep.subr.mxu0 0.0
  %811 = vmatpush1.msra.mxu0 0.0
  %812 = vmatprep.subr.mxu0 0.0
  %813 = vmatpush1.msra.mxu0 0.0
  %814 = vmatprep.subr.mxu0 0.0
  %815 = vmatpush1.msra.mxu0 0.0
  %816 = vmatprep.subr.mxu0 0.0
  %817 = vmatpush1.msra.mxu0 0.0
  %818 = vmatprep.subr.mxu0 0.0
  %819 = vmatpush1.msra.mxu0 0.0
  %820 = vmatprep.subr.mxu0 0.0
  %821 = vmatpush1.msra.mxu0 0.0
  %822 = vmatprep.subr.mxu0 0.0
  %823 = vmatpush1.msra.mxu0 0.0
  %824 = vmatprep.subr.mxu0 0.0
  %825 = vmatpush1.msra.mxu0 0.0
  %826 = vmatprep.subr.mxu0 0.0
  %827 = vmatpush1.msra.mxu0 0.0
  %828 = vmatprep.subr.mxu0 0.0
  %829 = vmatpush1.msra.mxu0 0.0
  %830 = vmatprep.mubr.f32.mxu0 0.0
  %831 = vmatmul.mubr.f32.gmra.mrb[0].mxu0 %v764
  %v832 = vpop.f32.mrb[0].mxu0
  %v833 = vadd.f32 0.0, %v832
  %v834 = vpop.f32.mrb[0].mxu0
  %835 = vdwg.mxu0
  %v836 = vadd.f32 %v760, %v833
  %v837 = vtanh.pop %v836
  %v838 = vmul.f32 %v837, 0.5
  %v839 = vadd.f32 %v838, 0.5
  %v840 = vmul.f32 %v839, %v753
  %842 = vrot.lane.b32.xlu0 %v837, 64
  %v843 = vpop.permute.xlu0 %842
  %v845 = vmul.f32 %v839, %v843
  %847 = vrot.lane.b32.xlu0 %v845, 32
  %v848 = vpop.permute.xlu0 %847
  %v850 = vadd.f32 %v840, %v848
  %v851 = vtanh.pop %v850
  %853 = vrot.lane.b32.xlu0 %v851, 64
  %v854 = vpop.permute.xlu0 %853
  %v856 = vmul.f32 %v839, %v854
  %v857 = vld [vmem:[#allocation2 + $0x38] sm:$0xff]
  %859 = vrot.lane.b32.xlu0 %v856, 32
  %v860 = vpop.permute.xlu0 %859
  %v861 = vsel %vm180, %v860, 0
  %863 = vmatprep.subr.mxu0 0.0
  %864 = vmatpush1.msra.mxu0 %v175
  %865 = vmatprep.subr.mxu0 0.0
  %866 = vmatpush1.msra.mxu0 %v176
  %867 = vmatprep.subr.mxu0 0.0
  %868 = vmatpush1.msra.mxu0 %v177
  %869 = vmatprep.subr.mxu0 0.0
  %870 = vmatpush1.msra.mxu0 %v178
  %871 = vmatprep.subr.mxu0 0.0
  %872 = vmatpush1.msra.mxu0 0.0
  %873 = vmatprep.subr.mxu0 0.0
  %874 = vmatpush1.msra.mxu0 0.0
  %875 = vmatprep.subr.mxu0 0.0
  %876 = vmatpush1.msra.mxu0 0.0
  %877 = vmatprep.subr.mxu0 0.0
  %878 = vmatpush1.msra.mxu0 0.0
  %879 = vmatprep.subr.mxu0 0.0
  %880 = vmatpush1.msra.mxu0 0.0
  %881 = vmatprep.subr.mxu0 0.0
  %882 = vmatpush1.msra.mxu0 0.0
  %883 = vmatprep.subr.mxu0 0.0
  %884 = vmatpush1.msra.mxu0 0.0
  %885 = vmatprep.subr.mxu0 0.0
  %886 = vmatpush1.msra.mxu0 0.0
  %887 = vmatprep.subr.mxu0 0.0
  %888 = vmatpush1.msra.mxu0 0.0
  %889 = vmatprep.subr.mxu0 0.0
  %890 = vmatpush1.msra.mxu0 0.0
  %891 = vmatprep.subr.mxu0 0.0
  %892 = vmatpush1.msra.mxu0 0.0
  %893 = vmatprep.subr.mxu0 0.0
  %894 = vmatpush1.msra.mxu0 0.0
  %895 = vmatprep.subr.mxu0 0.0
  %896 = vmatpush1.msra.mxu0 0.0
  %897 = vmatprep.subr.mxu0 0.0
  %898 = vmatpush1.msra.mxu0 0.0
  %899 = vmatprep.subr.mxu0 0.0
  %900 = vmatpush1.msra.mxu0 0.0
  %901 = vmatprep.subr.mxu0 0.0
  %902 = vmatpush1.msra.mxu0 0.0
  %903 = vmatprep.subr.mxu0 0.0
  %904 = vmatpush1.msra.mxu0 0.0
  %905 = vmatprep.subr.mxu0 0.0
  %906 = vmatpush1.msra.mxu0 0.0
  %907 = vmatprep.subr.mxu0 0.0
  %908 = vmatpush1.msra.mxu0 0.0
  %909 = vmatprep.subr.mxu0 0.0
  %910 = vmatpush1.msra.mxu0 0.0
  %911 = vmatprep.subr.mxu0 0.0
  %912 = vmatpush1.msra.mxu0 0.0
  %913 = vmatprep.subr.mxu0 0.0
  %914 = vmatpush1.msra.mxu0 0.0
  %915 = vmatprep.subr.mxu0 0.0
  %916 = vmatpush1.msra.mxu0 0.0
  %917 = vmatprep.subr.mxu0 0.0
  %918 = vmatpush1.msra.mxu0 0.0
  %919 = vmatprep.subr.mxu0 0.0
  %920 = vmatpush1.msra.mxu0 0.0
  %921 = vmatprep.subr.mxu0 0.0
  %922 = vmatpush1.msra.mxu0 0.0
  %923 = vmatprep.subr.mxu0 0.0
  %924 = vmatpush1.msra.mxu0 0.0
  %925 = vmatprep.subr.mxu0 0.0
  %926 = vmatpush1.msra.mxu0 0.0
  %927 = vmatprep.mubr.f32.mxu0 0.0
  %928 = vmatmul.mubr.f32.gmra.mrb[0].mxu0 %v861
  %v929 = vpop.f32.mrb[0].mxu0
  %v930 = vadd.f32 0.0, %v929
  %v931 = vpop.f32.mrb[0].mxu0
  %932 = vdwg.mxu0
  %v933 = vadd.f32 %v857, %v930
  %v934 = vtanh.pop %v933
  %v935 = vmul.f32 %v934, 0.5
  %v936 = vadd.f32 %v935, 0.5
  %v937 = vmul.f32 %v936, %v850
  %939 = vrot.lane.b32.xlu0 %v934, 64
  %v940 = vpop.permute.xlu0 %939
  %v942 = vmul.f32 %v936, %v940
  %944 = vrot.lane.b32.xlu0 %v942, 32
  %v945 = vpop.permute.xlu0 %944
  %v947 = vadd.f32 %v937, %v945
  %v948 = vtanh.pop %v947
  %950 = vrot.lane.b32.xlu0 %v948, 64
  %v951 = vpop.permute.xlu0 %950
  %v953 = vmul.f32 %v936, %v951
  %955 = vrot.lane.b32.xlu0 %v953, 32
  %v956 = vpop.permute.xlu0 %955
  %958 = vst.msk [vmem:[%s4] sm:$0xff] %vm180, %v956
  // Predicated region
  $region18: #{imu_feat_rnn1_forward.1} parent=0 // pred_check
    _
  $region19: #{imu_feat_rnn1_forward.1} parent=0 // pred_check_branch
    %960 = sbr.rel (0) target = $region21
  $region20: #{imu_feat_rnn1_forward.1} parent=0 // pred_region
    _
  $region21: #{imu_feat_rnn1_forward.1} parent=0 // pred_fallthru
    _
  // Predicated region
  $region22: #{imu_feat_rnn1_forward.1} parent=0 // pred_check
    _
  $region23: #{imu_feat_rnn1_forward.1} parent=0 // pred_check_branch
    %962 = sbr.rel (0) target = $region25
  $region24: #{imu_feat_rnn1_forward.1} parent=0 // pred_region
    _
  $region25: #{imu_feat_rnn1_forward.1} parent=0 // pred_fallthru
    _

</llo_original>
